<compile_context>
chip_gen: v5e
topology: v5e:2x2
jax: 0.10.0
libtpu: 0.0.40
codegen_flags: <defaults>
</compile_context>

<pallas_src>
import jax
import jax.numpy as jnp
from jax.experimental import pallas as pl
from jax.experimental.pallas import tpu as pltpu


_MIN_ROW_CAP = 1024                       # baseline row cap (large-C configs)
_TILE_TARGET_BYTES = 2 * 1024 * 1024      # aim for >= ~2 MiB x-tiles for small C
_FALLBACK_VMEM_CAPACITY = 64 * 1024 * 1024  # v7x floor if get_tpu_info() fails


def senet_kernel(x_ref, w1_ref, w2_ref, o_ref):
    x = x_ref[...]                                            # (tb, C)
    # squeeze: Linear(C -> C//ratio, bias=False) + ReLU.  MXU operands take the
    # weight dtype (bf16 weights -> bf16 MXU ops), f32 accumulation.
    h = jnp.dot(x.astype(w1_ref.dtype), w1_ref[...],
                preferred_element_type=jnp.float32)
    h = jnp.maximum(h, 0.0).astype(w2_ref.dtype)
    # excitation: Linear(C//ratio -> C, bias=False) + sigmoid (EUP).
    g = jnp.dot(h, w2_ref[...], preferred_element_type=jnp.float32)
    g = jax.nn.sigmoid(g)
    # Gate in the input dtype: f32 stays f32; bf16 x keeps the multiply native
    # bf16 on v6e/v7x and avoids a tb x C f32 temporary of x.
    o_ref[...] = (x * g.astype(x.dtype)).astype(o_ref.dtype)


def senet_params_from_pytorch(w1, w2):
    """One-time layout conversion (hoist out of the per-call path).

    w1: PyTorch weight of shape (C//ratio, C)  ->  w1_t: (C, C//ratio)
    w2: PyTorch weight of shape (C, C//ratio)  ->  w2_t: (C//ratio, C)
    """
    # TODO(synk): if production C is not a multiple of 128, pad C to the next
    # multiple of 128 here (and in the caller's x layout) so output stores stay
    # full-lane `vst` instead of masked `vst.msk`.
    return jnp.asarray(w1).T, jnp.asarray(w2).T


def _vmem_budget():
    """Generation-aware (budget_for_tiles, scoped_vmem_limit) in bytes."""
    try:
        capacity = int(pltpu.get_tpu_info().vmem_capacity_bytes)
    except Exception:
        capacity = _FALLBACK_VMEM_CAPACITY
    budget = (capacity * 2) // 5      # ~40%: pipeline buffers + weights + temps
    limit = (capacity * 3) // 4       # ~75%: scoped VMEM limit, with headroom
    return budget, limit


def _choose_tb(B, C, H, x_itemsize, w_itemsize, budget_bytes,
               double_buffer_weights):
    """Pick a batch tile: big enough to hit the HBM roofline, small enough to
    fit the VMEM budget (incl. in-kernel temporaries) and to keep >= 2 grid
    steps (so both v7x TensorCores get work)."""
    sublane = 8 * max(1, 4 // max(1, x_itemsize))    # 8 f32 / 16 bf16 / 32 int8
    if B <= sublane:
        return B                                     # single full-extent block

    wmul = 2 if double_buffer_weights else 1
    weight_bytes = wmul * 2 * C * H * w_itemsize
    # Per-row VMEM: double-buffered x + out pipeline tiles, plus in-kernel
    # temporaries (f32 gate, MXU-feed cast, gated product) ~ 12*C bytes.
    per_row = 4 * C * x_itemsize + 12 * C
    avail = max(budget_bytes - weight_bytes, sublane * per_row)
    cap = max(sublane, (avail // per_row) // sublane * sublane)

    # Row cap: at least _MIN_ROW_CAP rows, more when C is small so each DMA is
    # still >= ~2 MiB (fewer grid steps, bigger transfers).
    target_rows = pl.cdiv(_TILE_TARGET_BYTES, C * x_itemsize)
    row_cap = max(_MIN_ROW_CAP,
                  ((target_rows + sublane - 1) // sublane) * sublane)
    cap = min(cap, row_cap)

    # Keep at least two grid steps so the parallel batch axis can shard across
    # v7x's two TensorCores (negligible cost on v5e/v6e: ~0.35 us per step).
    half = ((pl.cdiv(B, 2) + sublane - 1) // sublane) * sublane
    cap = min(cap, max(sublane, half))

    # Balance tiles across the grid (no host-side padding; Pallas handles the
    # ragged final block: per-row garbage reads, OOB writes dropped).
    num_tiles = pl.cdiv(B, cap)
    tb = pl.cdiv(B, num_tiles)
    return ((tb + sublane - 1) // sublane) * sublane


def _build(x, w1_t, w2_t, tb, vmem_limit, single_buffer_weights):
    B, C = x.shape
    H = w1_t.shape[1]
    grid_b = pl.cdiv(B, tb)
    # Constant index_map -> weights are only DMA'd once; Buffered(1) drops the
    # useless second buffer and frees VMEM for a larger batch tile.
    w_kwargs = ({"pipeline_mode": pl.Buffered(1)}
                if single_buffer_weights else {})
    cost = pl.CostEstimate(
        flops=4 * B * C * H + B * C,
        transcendentals=B * C,
        bytes_accessed=(2 * B * C * x.dtype.itemsize
                        + 2 * C * H * w1_t.dtype.itemsize),
    )
    return pl.pallas_call(
        senet_kernel,
        out_shape=jax.ShapeDtypeStruct((B, C), x.dtype),
        grid_spec=pltpu.PrefetchScalarGridSpec(
            num_scalar_prefetch=0,
            grid=(grid_b,),
            in_specs=[
                pl.BlockSpec((tb, C), lambda i: (i, 0)),
                pl.BlockSpec((C, H), lambda i: (0, 0), **w_kwargs),
                pl.BlockSpec((H, C), lambda i: (0, 0), **w_kwargs),
            ],
            out_specs=pl.BlockSpec((tb, C), lambda i: (i, 0)),
        ),
        compiler_params=pltpu.CompilerParams(
            dimension_semantics=("parallel",),
            vmem_limit_bytes=int(vmem_limit),
        ),
        cost_estimate=cost,
    )(x, w1_t, w2_t)


def senet_forward(x, w1_t, w2_t, *, tb=None):
    """x: [B, C]; w1_t: [C, C//ratio]; w2_t: [C//ratio, C] (pre-transposed)."""
    B, C = x.shape
    Cw, H = w1_t.shape
    assert Cw == C and w2_t.shape == (H, C)

    budget, vmem_limit = _vmem_budget()
    tb1 = tb if tb is not None else _choose_tb(
        B, C, H, x.dtype.itemsize, w1_t.dtype.itemsize, budget,
        double_buffer_weights=False)
    try:
        return _build(x, w1_t, w2_t, tb1, vmem_limit, True)
    except Exception:
        # Fallback for Pallas versions that reject pipeline_mode=Buffered(1):
        # default double-buffered weights, with tb re-derived under the 2x
        # weight accounting (never a larger VMEM footprint than the attempt
        # above, so a real VMEM failure is not masked by a worse config).
        tb2 = _choose_tb(B, C, H, x.dtype.itemsize, w1_t.dtype.itemsize,
                         budget, double_buffer_weights=True)
        tb2 = min(tb1, tb2)
        return _build(x, w1_t, w2_t, tb2, vmem_limit, False)


def senet_reference(x, w1, w2):
    """Pure-JAX reference using the original PyTorch weight layouts."""
    gates = jnp.maximum(x @ w1.T, 0.0)
    gates = jax.nn.sigmoid(gates @ w2.T)
    return x * gates


if __name__ == "__main__":
    # Small but lane-dense demo config: channels a multiple of 128 so output
    # stores are unmasked full-lane vst.
    B, C, ratio = 16, 128, 8
    H = C // ratio

    key = jax.random.PRNGKey(0)
    kx, k1, k2 = jax.random.split(key, 3)

    x = jax.random.normal(kx, (B, C), dtype=jnp.float32)
    # Deterministic synthetic weights in PyTorch nn.Linear layout.
    w1 = jax.random.normal(k1, (H, C), dtype=jnp.float32) * (1.0 / float(C) ** 0.5)
    w2 = jax.random.normal(k2, (C, H), dtype=jnp.float32) * (1.0 / float(H) ** 0.5)

    # One-time (hoisted) transpose into the kernel's preferred layout.
    w1_t, w2_t = senet_params_from_pytorch(w1, w2)

    out = senet_forward(x, w1_t, w2_t)
    out = jax.block_until_ready(out)

    ref = senet_reference(x, w1, w2)
    assert out.shape == (B, C)
    assert jnp.allclose(out, ref, atol=1e-5, rtol=1e-5), "mismatch vs reference"

    print("KERNEL_OK")
</pallas_src>

<mosaic_0001>
module attributes {stable_mosaic.version = 11 : i64} {
  func.func @senet_kernel(%arg0: i32, %arg1: memref<8x128xf32, #tpu.memory_space<vmem>>, %arg2: memref<128x16xf32, #tpu.memory_space<vmem>>, %arg3: memref<16x128xf32, #tpu.memory_space<vmem>>, %arg4: memref<8x128xf32, #tpu.memory_space<vmem>>) attributes {dimension_semantics = [#tpu.dimension_semantics<parallel>], iteration_bounds = array<i64: 2>, scalar_prefetch = 0 : i64, scratch_operands = 0 : i64, tpu.core_type = #tpu.core_type<tc>, window_params = [{transform_indices = @transform_0, window_bounds = array<i64: 8, 128>}, {pipeline_mode = #tpu.pipeline_mode<synchronous>, transform_indices = @transform_1, window_bounds = array<i64: 128, 16>}, {pipeline_mode = #tpu.pipeline_mode<synchronous>, transform_indices = @transform_2, window_bounds = array<i64: 16, 128>}, {transform_indices = @transform_3, window_bounds = array<i64: 8, 128>}]} {
    %c0 = arith.constant 0 : index
    %c0_0 = arith.constant 0 : index
    %0 = vector.load %arg1[%c0, %c0_0] : memref<8x128xf32, #tpu.memory_space<vmem>>, vector<8x128xf32>
    %c0_1 = arith.constant 0 : index
    %c0_2 = arith.constant 0 : index
    %1 = vector.load %arg2[%c0_1, %c0_2] : memref<128x16xf32, #tpu.memory_space<vmem>>, vector<128x16xf32>
    %cst = arith.constant dense<0.000000e+00> : vector<8x16xf32>
    %2 = tpu.matmul %0, %1, %cst {dimension_numbers = #tpu.dot_dimension_numbers<[1], [0], [0], [1], [0, 0, 1, 1], [], []>} : vector<8x128xf32>, vector<128x16xf32>, vector<8x16xf32> -> vector<8x16xf32>
    %cst_3 = arith.constant 0.000000e+00 : f32
    %3 = vector.broadcast %cst_3 : f32 to vector<8x16xf32>
    %4 = arith.maximumf %2, %3 : vector<8x16xf32>
    %c0_4 = arith.constant 0 : index
    %c0_5 = arith.constant 0 : index
    %5 = vector.load %arg3[%c0_4, %c0_5] : memref<16x128xf32, #tpu.memory_space<vmem>>, vector<16x128xf32>
    %cst_6 = arith.constant dense<0.000000e+00> : vector<8x128xf32>
    %6 = tpu.matmul %4, %5, %cst_6 {dimension_numbers = #tpu.dot_dimension_numbers<[1], [0], [0], [1], [0, 0, 1, 1], [], []>} : vector<8x16xf32>, vector<16x128xf32>, vector<8x128xf32> -> vector<8x128xf32>
    %7 = arith.negf %6 : vector<8x128xf32>
    %8 = math.exp %7 : vector<8x128xf32>
    %cst_7 = arith.constant 1.000000e+00 : f32
    %9 = vector.broadcast %cst_7 : f32 to vector<8x128xf32>
    %10 = arith.addf %9, %8 : vector<8x128xf32>
    %11 = arith.divf %9, %10 : vector<8x128xf32>
    %12 = arith.mulf %0, %11 : vector<8x128xf32>
    %c0_8 = arith.constant 0 : index
    %c0_9 = arith.constant 0 : index
    %13 = vector.load %arg4[%c0_8, %c0_9] : memref<8x128xf32, #tpu.memory_space<vmem>>, vector<8x128xf32>
    tpu.vector_store %arg4[%c0_8, %c0_9], %12 {strides = array<i32>} : memref<8x128xf32, #tpu.memory_space<vmem>>, vector<8x128xf32>,
    return
  }
  func.func @transform_0(%arg0: i32) -> (i32, i32) {
    %c0_i32 = arith.constant 0 : i32
    %c0_i32_0 = arith.constant 0 : i32
    return %arg0, %c0_i32 : i32, i32
  }
  func.func @transform_1(%arg0: i32) -> (i32, i32) {
    %c0_i32 = arith.constant 0 : i32
    %c0_i32_0 = arith.constant 0 : i32
    %c0_i32_1 = arith.constant 0 : i32
    return %c0_i32, %c0_i32_0 : i32, i32
  }
  func.func @transform_2(%arg0: i32) -> (i32, i32) {
    %c0_i32 = arith.constant 0 : i32
    %c0_i32_0 = arith.constant 0 : i32
    %c0_i32_1 = arith.constant 0 : i32
    return %c0_i32, %c0_i32_0 : i32, i32
  }
  func.func @transform_3(%arg0: i32) -> (i32, i32) {
    %c0_i32 = arith.constant 0 : i32
    %c0_i32_0 = arith.constant 0 : i32
    return %arg0, %c0_i32 : i32, i32
  }
}

module attributes {stable_mosaic.version = 11 : i64} {
  func.func @senet_kernel(%arg0: i32, %arg1: memref<8x128xf32, #tpu.memory_space<vmem>>, %arg2: memref<128x16xf32, #tpu.memory_space<vmem>>, %arg3: memref<16x128xf32, #tpu.memory_space<vmem>>, %arg4: memref<8x128xf32, #tpu.memory_space<vmem>>) attributes {dimension_semantics = [#tpu.dimension_semantics<parallel>], iteration_bounds = array<i64: 2>, scalar_prefetch = 0 : i64, scratch_operands = 0 : i64, tpu.core_type = #tpu.core_type<tc>, window_params = [{transform_indices = @transform_0, window_bounds = array<i64: 8, 128>}, {pipeline_mode = #tpu.pipeline_mode<synchronous>, transform_indices = @transform_1, window_bounds = array<i64: 128, 16>}, {pipeline_mode = #tpu.pipeline_mode<synchronous>, transform_indices = @transform_2, window_bounds = array<i64: 16, 128>}, {transform_indices = @transform_3, window_bounds = array<i64: 8, 128>}]} {
    %c0 = arith.constant 0 : index
    %c0_0 = arith.constant 0 : index
    %0 = vector.load %arg1[%c0, %c0_0] : memref<8x128xf32, #tpu.memory_space<vmem>>, vector<8x128xf32>
    %c0_1 = arith.constant 0 : index
    %c0_2 = arith.constant 0 : index
    %1 = vector.load %arg2[%c0_1, %c0_2] : memref<128x16xf32, #tpu.memory_space<vmem>>, vector<128x16xf32>
    %cst = arith.constant dense<0.000000e+00> : vector<8x16xf32>
    %2 = tpu.matmul %0, %1, %cst {dimension_numbers = #tpu.dot_dimension_numbers<[1], [0], [0], [1], [0, 0, 1, 1], [], []>} : vector<8x128xf32>, vector<128x16xf32>, vector<8x16xf32> -> vector<8x16xf32>
    %cst_3 = arith.constant 0.000000e+00 : f32
    %3 = vector.broadcast %cst_3 : f32 to vector<8x16xf32>
    %4 = arith.maximumf %2, %3 : vector<8x16xf32>
    %c0_4 = arith.constant 0 : index
    %c0_5 = arith.constant 0 : index
    %5 = vector.load %arg3[%c0_4, %c0_5] : memref<16x128xf32, #tpu.memory_space<vmem>>, vector<16x128xf32>
    %cst_6 = arith.constant dense<0.000000e+00> : vector<8x128xf32>
    %6 = tpu.matmul %4, %5, %cst_6 {dimension_numbers = #tpu.dot_dimension_numbers<[1], [0], [0], [1], [0, 0, 1, 1], [], []>} : vector<8x16xf32>, vector<16x128xf32>, vector<8x128xf32> -> vector<8x128xf32>
    %7 = arith.negf %6 : vector<8x128xf32>
    %8 = math.exp %7 : vector<8x128xf32>
    %cst_7 = arith.constant 1.000000e+00 : f32
    %9 = vector.broadcast %cst_7 : f32 to vector<8x128xf32>
    %10 = arith.addf %9, %8 : vector<8x128xf32>
    %11 = arith.divf %9, %10 : vector<8x128xf32>
    %12 = arith.mulf %0, %11 : vector<8x128xf32>
    %c0_8 = arith.constant 0 : index
    %c0_9 = arith.constant 0 : index
    %13 = vector.load %arg4[%c0_8, %c0_9] : memref<8x128xf32, #tpu.memory_space<vmem>>, vector<8x128xf32>
    tpu.vector_store %arg4[%c0_8, %c0_9], %12 {strides = array<i32>} : memref<8x128xf32, #tpu.memory_space<vmem>>, vector<8x128xf32>,
    return
  }
  func.func @transform_0(%arg0: i32) -> (i32, i32) {
    %c0_i32 = arith.constant 0 : i32
    %c0_i32_0 = arith.constant 0 : i32
    return %arg0, %c0_i32 : i32, i32
  }
  func.func @transform_1(%arg0: i32) -> (i32, i32) {
    %c0_i32 = arith.constant 0 : i32
    %c0_i32_0 = arith.constant 0 : i32
    %c0_i32_1 = arith.constant 0 : i32
    return %c0_i32, %c0_i32_0 : i32, i32
  }
  func.func @transform_2(%arg0: i32) -> (i32, i32) {
    %c0_i32 = arith.constant 0 : i32
    %c0_i32_0 = arith.constant 0 : i32
    %c0_i32_1 = arith.constant 0 : i32
    return %c0_i32, %c0_i32_0 : i32, i32
  }
  func.func @transform_3(%arg0: i32) -> (i32, i32) {
    %c0_i32 = arith.constant 0 : i32
    %c0_i32_0 = arith.constant 0 : i32
    return %arg0, %c0_i32 : i32, i32
  }
}

</mosaic_0001>

<llo_original>
// kernel: tpu_custom_call.1
$region0: #{tpu_custom_call.1}
  #allocation0 [shape = 'u32[]', space=smem, size = 0x4, offset = 0x4, fixed_abs, tag = 'smem constant byte address 0x4 - core index']
  #allocation1 [shape = 'u32[72,128]{1,0:T(1,128)}', space=vmem, size = 0x9000, scoped, tag = 'internal scratch']
  %s0 = inlined_call_operand.vmem [shape: f32[16,128], index: 0, kind: input, shape index: {}]
  %s1 = inlined_call_operand.vmem [shape: f32[128,16], index: 1, kind: input, shape index: {}]
  %s2 = inlined_call_operand.vmem [shape: f32[16,128], index: 2, kind: input, shape index: {}]
  %s3 = inlined_call_operand.hbm [shape: f32[16,128], index: 3, kind: output, shape index: {}]
  %s4 = sld [smem:[#allocation0]]
  $region45: #{tpu_custom_call.1} parent=0
    _
  %s6 = ssub.s32 1, %s4
  %s7 = scalar_select 0, %s6, %s4
  $region1: #{tpu_custom_call.1} parent=0
    #allocation2 [shape = 'u8[8192]{0}', space=vmem, size = 0x2000, scoped, tag = 'output window, operand 0']
    #allocation3 [shape = 's32[2]{0}', space=sflag, size = 0x8, scoped, tag = 'scoped memory for tpu_custom_call.1']
    %8 = vsyncpa [#allocation3], 0
    %s9 = scalar_lea.sflag [#allocation3], 1
    %10 = vsyncpa %s9, 0
    loop: start=0, step=1, limit=4
    $region2: #{tpu_custom_call.1} parent=1 // loop_pre_header
      _
    $region3: #{tpu_custom_call.1} parent=1 // loop_header
      %s12 = sphi 0, %s16
      %p13 = scmp.ge.s32.totalorder %s12, 4
      %s22 = sphi 0, %s24
      %s25 = sphi 0, %s22
      %s26 = sphi 0, %s25
      %s42 = sphi 0, %s26
      %s46 = sphi 0, %s46
      %s48 = sphi 0, %s46
      %s49 = sphi 0, %s48
      %s63 = sphi 0, %s49
      %s67 = sphi 0, %s67
      %s69 = sphi 0, %s67
      %s70 = sphi 0, %s69
      %s84 = sphi 0, %s70
      %s90 = sphi 0, %s92
      %s93 = sphi 0, %s90
      %s94 = sphi 0, %s93
      %s110 = sphi 0, %s94
    $region4: #{tpu_custom_call.1} parent=1 // loop_header_branch
      %15 = sbr.rel (%p13) target = $region8
    $region5: #{tpu_custom_call.1} parent=1 // loop_body
      %s17 = ssub.s32 %s12, 1
      %s18 = ssub.s32 %s12, 2
      %s19 = sadd.s32 %s12, 1
      %s20 = ssub.s32 %s12, %s19
      %p21 = scmp.eq.s32.totalorder %s20, 0
      %s23 = sadd.s32 %s22, 1
      %s24 = scalar_select %p21, %s22, %s23
      %p27 = pneg %p21
      %p28 = scmp.eq.s32.totalorder %s12, 1
      %p29 = por %p27, %p28
      %p30 = scmp.ne.s32.totalorder %s22, %s25
      %p31 = scmp.eq.s32.totalorder %s12, 0
      %p32 = por %p30, %p31
      %p33 = scmp.ne.s32.totalorder %s22, %s25
      %p34 = scmp.eq.s32.totalorder %s17, 1
      %p35 = por %p33, %p34
      %p36 = scmp.ne.s32.totalorder %s25, %s26
      %p37 = scmp.eq.s32.totalorder %s17, 0
      %p38 = por %p36, %p37
      %p39 = scmp.ne.s32.totalorder %s25, %s26
      %p40 = scmp.eq.s32.totalorder %s18, 1
      %p41 = por %p39, %p40
      %p43 = scmp.ne.s32.totalorder %s26, %s42
      %p44 = scmp.eq.s32.totalorder %s18, 0
      %p45 = por %p43, %p44
      %s47 = sadd.s32 %s46, 1
      %p50 = scmp.eq.s32.totalorder %s12, 1
      %p51 = scmp.ne.s32.totalorder %s46, %s48
      %p52 = scmp.eq.s32.totalorder %s12, 0
      %p53 = por %p51, %p52
      %p54 = scmp.ne.s32.totalorder %s46, %s48
      %p55 = scmp.eq.s32.totalorder %s17, 1
      %p56 = por %p54, %p55
      %p57 = scmp.ne.s32.totalorder %s48, %s49
      %p58 = scmp.eq.s32.totalorder %s17, 0
      %p59 = por %p57, %p58
      %p60 = scmp.ne.s32.totalorder %s48, %s49
      %p61 = scmp.eq.s32.totalorder %s18, 1
      %p62 = por %p60, %p61
      %p64 = scmp.ne.s32.totalorder %s49, %s63
      %p65 = scmp.eq.s32.totalorder %s18, 0
      %p66 = por %p64, %p65
      %s68 = sadd.s32 %s67, 1
      %p71 = scmp.eq.s32.totalorder %s12, 1
      %p72 = scmp.ne.s32.totalorder %s67, %s69
      %p73 = scmp.eq.s32.totalorder %s12, 0
      %p74 = por %p72, %p73
      %p75 = scmp.ne.s32.totalorder %s67, %s69
      %p76 = scmp.eq.s32.totalorder %s17, 1
      %p77 = por %p75, %p76
      %p78 = scmp.ne.s32.totalorder %s69, %s70
      %p79 = scmp.eq.s32.totalorder %s17, 0
      %p80 = por %p78, %p79
      %p81 = scmp.ne.s32.totalorder %s69, %s70
      %p82 = scmp.eq.s32.totalorder %s18, 1
      %p83 = por %p81, %p82
      %p85 = scmp.ne.s32.totalorder %s70, %s84
      %p86 = scmp.eq.s32.totalorder %s18, 0
      %p87 = por %p85, %p86
      %s88 = ssub.s32 %s12, %s19
      %p89 = scmp.eq.s32.totalorder %s88, 0
      %s91 = sadd.s32 %s90, 1
      %s92 = scalar_select %p89, %s90, %s91
      %p95 = pneg %p89
      %p96 = scmp.eq.s32.totalorder %s12, 1
      %p97 = por %p95, %p96
      %p98 = scmp.ne.s32.totalorder %s90, %s93
      %p99 = scmp.eq.s32.totalorder %s12, 0
      %p100 = por %p98, %p99
      %p101 = scmp.ne.s32.totalorder %s90, %s93
      %p102 = scmp.eq.s32.totalorder %s17, 1
      %p103 = por %p101, %p102
      %p104 = scmp.ne.s32.totalorder %s93, %s94
      %p105 = scmp.eq.s32.totalorder %s17, 0
      %p106 = por %p104, %p105
      %p107 = scmp.ne.s32.totalorder %s93, %s94
      %p108 = scmp.eq.s32.totalorder %s18, 1
      %p109 = por %p107, %p108
      %p111 = scmp.ne.s32.totalorder %s94, %s110
      %p112 = scmp.eq.s32.totalorder %s18, 0
      %p113 = por %p111, %p112
      %p114 = scmp.le.s32.totalorder 1, %s12
      %p115 = scmp.lt.s32.totalorder %s12, 3
      %p116 = pnand %p114, %p115
      %p117 = pneg %p116
      // Predicated region
      $region9: #{tpu_custom_call.1} parent=5 // pred_check
        _
      $region10: #{tpu_custom_call.1} parent=5 // pred_check_branch
        %119 = sbr.rel (%p116) target = $region12
      $region11: #{tpu_custom_call.1} parent=5 // pred_region
        %s120 = ssub.s32 %s12, 1
        // Predicated region
        $region13: #{tpu_custom_call.1} parent=11 // pred_check
          %p121 = pneg %p59
        $region14: #{tpu_custom_call.1} parent=11 // pred_check_branch
          %123 = sbr.rel (%p121) target = $region16
        $region15: #{tpu_custom_call.1} parent=11 // pred_region
          _
        $region16: #{tpu_custom_call.1} parent=11 // pred_fallthru
          _
        // Predicated region
        $region17: #{tpu_custom_call.1} parent=11 // pred_check
          %p124 = pneg %p80
        $region18: #{tpu_custom_call.1} parent=11 // pred_check_branch
          %126 = sbr.rel (%p124) target = $region20
        $region19: #{tpu_custom_call.1} parent=11 // pred_region
          _
        $region20: #{tpu_custom_call.1} parent=11 // pred_fallthru
          _
      $region12: #{tpu_custom_call.1} parent=5 // pred_fallthru
        _
      %p127 = scmp.lt.s32.totalorder %s12, 2
      // Predicated region
      $region21: #{tpu_custom_call.1} parent=5 // pred_check
        %p128 = pneg %p127
      $region22: #{tpu_custom_call.1} parent=5 // pred_check_branch
        %130 = sbr.rel (%p128) target = $region24
      $region23: #{tpu_custom_call.1} parent=5 // pred_region
        // Predicated region
        $region25: #{tpu_custom_call.1} parent=23 // pred_check
          %p131 = pneg %p32
        $region26: #{tpu_custom_call.1} parent=23 // pred_check_branch
          %133 = sbr.rel (%p131) target = $region28
        $region27: #{tpu_custom_call.1} parent=23 // pred_region
          %p134 = scmp.lt.s32.totalorder %s12, 1
          %s135 = scalar_select %p134, %s12, 1
          %s136 = smul.addr %s135, 8
          %s137 = scalar_lea.vmem %s0, %s136
        $region28: #{tpu_custom_call.1} parent=23 // pred_fallthru
          _
      $region24: #{tpu_custom_call.1} parent=5 // pred_fallthru
        _
      %p138 = scmp.le.s32.totalorder 1, %s12
      %p139 = scmp.lt.s32.totalorder %s12, 3
      %p140 = pnand %p138, %p139
      %p141 = pneg %p140
      // Predicated region
      $region29: #{tpu_custom_call.1} parent=5 // pred_check
        _
      $region30: #{tpu_custom_call.1} parent=5 // pred_check_branch
        %143 = sbr.rel (%p140) target = $region32
      $region31: #{tpu_custom_call.1} parent=5 // pred_region
        %s144 = ssub.s32 %s12, 1
        %p145 = scmp.lt.s32.totalorder %s17, 1
        %s146 = scalar_select %p145, %s17, 1
        %s147 = smul.addr %s146, 8
        %s148 = scalar_lea.vmem %s0, %s147
        %p149 = pneg %p38
        %p150 = pneg %p35
        %p151 = pneg %p59
        %p152 = pneg %p56
        %p153 = pneg %p80
        %p154 = pneg %p77
        %p155 = pneg %p106
        %p156 = pneg %p103
        %s157 = sand.u32 %s93, 1
        %s158 = scalar_lea.sflag [#allocation3], %s157
        %s159 = sand.u32 %s93, 1
        %s160 = smul.addr %s159, 8
        %s161 = scalar_lea.vmem [#allocation2], %s160
        %p162 = scmp.lt.s32.totalorder %s17, 1
        %s163 = scalar_select %p162, %s17, 1
        %s164 = smul.addr %s163, 8
        %s165 = scalar_lea.vmem %s0, %s164
        %v166 = vld [vmem:[%s165] sm:$0xff]
        %v167 = vld [vmem:[%s1] sm:$0xff]
        %v168 = vld [vmem:[%s1 + $0x8] sm:$0xff]
        %v169 = vld [vmem:[%s1 + $0x10] sm:$0xff]
        %v170 = vld [vmem:[%s1 + $0x18] sm:$0xff]
        %v171 = vld [vmem:[%s1 + $0x20] sm:$0xff]
        %v172 = vld [vmem:[%s1 + $0x28] sm:$0xff]
        %v173 = vld [vmem:[%s1 + $0x30] sm:$0xff]
        %v174 = vld [vmem:[%s1 + $0x38] sm:$0xff]
        %v175 = vld [vmem:[%s1 + $0x40] sm:$0xff]
        %v176 = vld [vmem:[%s1 + $0x48] sm:$0xff]
        %v177 = vld [vmem:[%s1 + $0x50] sm:$0xff]
        %v178 = vld [vmem:[%s1 + $0x58] sm:$0xff]
        %v179 = vld [vmem:[%s1 + $0x60] sm:$0xff]
        %v180 = vld [vmem:[%s1 + $0x68] sm:$0xff]
        %v181 = vld [vmem:[%s1 + $0x70] sm:$0xff]
        %v182 = vld [vmem:[%s1 + $0x78] sm:$0xff]
        %183 = vmatpush.msra.mxu0 %v182
        %184 = vmatpush.msra.mxu0 %v181
        %185 = vmatpush.msra.mxu0 %v180
        %186 = vmatpush.msra.mxu0 %v179
        %187 = vmatpush.msra.mxu0 %v178
        %188 = vmatpush.msra.mxu0 %v177
        %189 = vmatpush.msra.mxu0 %v176
        %190 = vmatpush.msra.mxu0 %v175
        %191 = vmatpush.msra.mxu0 %v174
        %192 = vmatpush.msra.mxu0 %v173
        %193 = vmatpush.msra.mxu0 %v172
        %194 = vmatpush.msra.mxu0 %v171
        %195 = vmatpush.msra.mxu0 %v170
        %196 = vmatpush.msra.mxu0 %v169
        %197 = vmatpush.msra.mxu0 %v168
        %198 = vmatpush.msra.mxu0 %v167
        %199 = vmatmul.f32.gmra.mxu0 %v166
        %v200 = vpop.f32.mrf.mxu0
        %v201 = vadd.f32 0.0, %v200
        %202 = vdwg.mxu0
        %v203 = vmax.f32 %v201, 0.0
        %v204 = vld [vmem:[%s2] sm:$0xff]
        %v205 = vld [vmem:[%s2 + $0x8] sm:$0xff]
        %vm206 = vcmask 130048
        %v208 = vsel %vm206, %v203, 0
        %210 = vmatpush.msra.mxu0 0.0
        %211 = vmatpush.msra.mxu0 0.0
        %212 = vmatpush.msra.mxu0 0.0
        %213 = vmatpush.msra.mxu0 0.0
        %214 = vmatpush.msra.mxu0 0.0
        %215 = vmatpush.msra.mxu0 0.0
        %216 = vmatpush.msra.mxu0 0.0
        %217 = vmatpush.msra.mxu0 0.0
        %218 = vmatpush.msra.mxu0 0.0
        %219 = vmatpush.msra.mxu0 0.0
        %220 = vmatpush.msra.mxu0 0.0
        %221 = vmatpush.msra.mxu0 0.0
        %222 = vmatpush.msra.mxu0 0.0
        %223 = vmatpush.msra.mxu0 0.0
        %224 = vmatpush.msra.mxu0 %v205
        %225 = vmatpush.msra.mxu0 %v204
        %226 = vmatmul.f32.gmra.mxu0 %v208
        %v227 = vpop.f32.mrf.mxu0
        %v228 = vadd.f32 0.0, %v227
        %229 = vdwg.mxu0
        %v230 = vxor.u32 %v228, 2147483648
        %v231 = vmul.f32 %v230, 1.442695
        %v232 = vpow.pop %v231
        %v233 = vadd.f32 %v232, 1.0
        %v234 = vrcp.pop %v233
        %v235 = vmul.f32 %v233, %v234
        %v236 = vsub.f32 1.0, %v235
        %v237 = vmul.f32 %v234, %v236
        %v238 = vadd.f32 %v234, %v237
        %vm239 = vweird.f32 %v233
        %vm240 = vweird.f32 %v234
        %vm241 = vmor %vm239, %vm240
        %v242 = vsel %vm241, %v234, %v238
        %v243 = vand.u32 2147483647, %v233
        %vm244 = vcmp.eq.f32.partialorder %v243, 8.507059e+37
        %v245 = vand.u32 %v233, 2147483648
        %v246 = vor.u32 1.1754944e-38, %v245
        %v247 = vsel %vm244, %v246, %v242
        %v248 = vmul.f32 1.0, %v247
        %v249 = vmul.f32 %v166, %v248
        %250 = vst [vmem:[%s161] sm:$0xff] %v249
        %s251 = sand.u32 %s93, 1
        %s252 = scalar_lea.sflag [#allocation3], %s251
        %s253 = sand.u32 %s93, 1
        %s254 = smul.addr %s253, 8
        %s255 = scalar_lea.vmem [#allocation2], %s254
        // Predicated region
        $region33: #{tpu_custom_call.1} parent=31 // pred_check
          %p256 = pneg %p103
        $region34: #{tpu_custom_call.1} parent=31 // pred_check_branch
          %258 = sbr.rel (%p256) target = $region36
        $region35: #{tpu_custom_call.1} parent=31 // pred_region
          %260 = vsyncadd %s252, 0
          %s261 = smul.addr %s17, 8
          %s262 = scalar_lea.hbm %s3, %s261
          %s264 = sshll.u32 %s255, 4
          %s265 = int_to_ptr.vmem [resolvable:$true] %s264
          %s266 = sshll.u32 %s262, 4
          %s267 = int_to_ptr.hbm [resolvable:$true] %s266
          %269 = dma.vmem_to_hbm [thread:$0]  %s265, 128, %s267, %s252
        $region36: #{tpu_custom_call.1} parent=31 // pred_fallthru
          _
      $region32: #{tpu_custom_call.1} parent=5 // pred_fallthru
        _
      %p270 = scmp.le.s32.totalorder 2, %s12
      // Predicated region
      $region37: #{tpu_custom_call.1} parent=5 // pred_check
        %p271 = pneg %p270
      $region38: #{tpu_custom_call.1} parent=5 // pred_check_branch
        %273 = sbr.rel (%p271) target = $region40
      $region39: #{tpu_custom_call.1} parent=5 // pred_region
        %s274 = ssub.s32 %s12, 2
        // Predicated region
        $region41: #{tpu_custom_call.1} parent=39 // pred_check
          %p275 = pneg %p109
        $region42: #{tpu_custom_call.1} parent=39 // pred_check_branch
          %277 = sbr.rel (%p275) target = $region44
        $region43: #{tpu_custom_call.1} parent=39 // pred_region
          %s278 = sand.u32 %s94, 1
          %s279 = scalar_lea.sflag [#allocation3], %s278
          %s280 = sand.u32 %s94, 1
          %s281 = smul.addr %s280, 8
          %s282 = scalar_lea.vmem [#allocation2], %s281
          %284 = dma.done %s279, 128
        $region44: #{tpu_custom_call.1} parent=39 // pred_fallthru
          _
      $region40: #{tpu_custom_call.1} parent=5 // pred_fallthru
        _
    $region6: #{tpu_custom_call.1} parent=1 // loop_footer
      %s16 = sadd.s32 1, %s12
    $region7: #{tpu_custom_call.1} parent=1 // loop_footer_branch
      %11 = sbr.rel target = $region3
    $region8: #{tpu_custom_call.1} parent=1 // loop_exit
      _
    %285 = vsyncpa [#allocation3], 1
    %s286 = scalar_lea.sflag [#allocation3], 1
    %287 = vsyncpa %s286, 1

// kernel: tpu_custom_call.1
$region0: #{tpu_custom_call.1}
  #allocation0 [shape = 'u32[]', space=smem, size = 0x4, offset = 0x4, fixed_abs, tag = 'smem constant byte address 0x4 - core index']
  #allocation1 [shape = 'u32[72,128]{1,0:T(1,128)}', space=vmem, size = 0x9000, scoped, tag = 'internal scratch']
  %s0 = inlined_call_operand.vmem [shape: f32[16,128], index: 0, kind: input, shape index: {}]
  %s1 = inlined_call_operand.vmem [shape: f32[128,16], index: 1, kind: input, shape index: {}]
  %s2 = inlined_call_operand.vmem [shape: f32[16,128], index: 2, kind: input, shape index: {}]
  %s3 = inlined_call_operand.hbm [shape: f32[16,128], index: 3, kind: output, shape index: {}]
  %s4 = sld [smem:[#allocation0]]
  $region45: #{tpu_custom_call.1} parent=0
    _
  %s6 = ssub.s32 1, %s4
  %s7 = scalar_select 0, %s6, %s4
  $region1: #{tpu_custom_call.1} parent=0
    #allocation2 [shape = 'u8[8192]{0}', space=vmem, size = 0x2000, scoped, tag = 'output window, operand 0']
    #allocation3 [shape = 's32[2]{0}', space=sflag, size = 0x8, scoped, tag = 'scoped memory for tpu_custom_call.1']
    %8 = vsyncpa [#allocation3], 0
    %s9 = scalar_lea.sflag [#allocation3], 1
    %10 = vsyncpa %s9, 0
    loop: start=0, step=1, limit=4
    $region2: #{tpu_custom_call.1} parent=1 // loop_pre_header
      _
    $region3: #{tpu_custom_call.1} parent=1 // loop_header
      %s12 = sphi 0, %s16
      %p13 = scmp.ge.s32.totalorder %s12, 4
      %s22 = sphi 0, %s24
      %s25 = sphi 0, %s22
      %s26 = sphi 0, %s25
      %s42 = sphi 0, %s26
      %s46 = sphi 0, %s46
      %s48 = sphi 0, %s46
      %s49 = sphi 0, %s48
      %s63 = sphi 0, %s49
      %s67 = sphi 0, %s67
      %s69 = sphi 0, %s67
      %s70 = sphi 0, %s69
      %s84 = sphi 0, %s70
      %s90 = sphi 0, %s92
      %s93 = sphi 0, %s90
      %s94 = sphi 0, %s93
      %s110 = sphi 0, %s94
    $region4: #{tpu_custom_call.1} parent=1 // loop_header_branch
      %15 = sbr.rel (%p13) target = $region8
    $region5: #{tpu_custom_call.1} parent=1 // loop_body
      %s17 = ssub.s32 %s12, 1
      %s18 = ssub.s32 %s12, 2
      %s19 = sadd.s32 %s12, 1
      %s20 = ssub.s32 %s12, %s19
      %p21 = scmp.eq.s32.totalorder %s20, 0
      %s23 = sadd.s32 %s22, 1
      %s24 = scalar_select %p21, %s22, %s23
      %p27 = pneg %p21
      %p28 = scmp.eq.s32.totalorder %s12, 1
      %p29 = por %p27, %p28
      %p30 = scmp.ne.s32.totalorder %s22, %s25
      %p31 = scmp.eq.s32.totalorder %s12, 0
      %p32 = por %p30, %p31
      %p33 = scmp.ne.s32.totalorder %s22, %s25
      %p34 = scmp.eq.s32.totalorder %s17, 1
      %p35 = por %p33, %p34
      %p36 = scmp.ne.s32.totalorder %s25, %s26
      %p37 = scmp.eq.s32.totalorder %s17, 0
      %p38 = por %p36, %p37
      %p39 = scmp.ne.s32.totalorder %s25, %s26
      %p40 = scmp.eq.s32.totalorder %s18, 1
      %p41 = por %p39, %p40
      %p43 = scmp.ne.s32.totalorder %s26, %s42
      %p44 = scmp.eq.s32.totalorder %s18, 0
      %p45 = por %p43, %p44
      %s47 = sadd.s32 %s46, 1
      %p50 = scmp.eq.s32.totalorder %s12, 1
      %p51 = scmp.ne.s32.totalorder %s46, %s48
      %p52 = scmp.eq.s32.totalorder %s12, 0
      %p53 = por %p51, %p52
      %p54 = scmp.ne.s32.totalorder %s46, %s48
      %p55 = scmp.eq.s32.totalorder %s17, 1
      %p56 = por %p54, %p55
      %p57 = scmp.ne.s32.totalorder %s48, %s49
      %p58 = scmp.eq.s32.totalorder %s17, 0
      %p59 = por %p57, %p58
      %p60 = scmp.ne.s32.totalorder %s48, %s49
      %p61 = scmp.eq.s32.totalorder %s18, 1
      %p62 = por %p60, %p61
      %p64 = scmp.ne.s32.totalorder %s49, %s63
      %p65 = scmp.eq.s32.totalorder %s18, 0
      %p66 = por %p64, %p65
      %s68 = sadd.s32 %s67, 1
      %p71 = scmp.eq.s32.totalorder %s12, 1
      %p72 = scmp.ne.s32.totalorder %s67, %s69
      %p73 = scmp.eq.s32.totalorder %s12, 0
      %p74 = por %p72, %p73
      %p75 = scmp.ne.s32.totalorder %s67, %s69
      %p76 = scmp.eq.s32.totalorder %s17, 1
      %p77 = por %p75, %p76
      %p78 = scmp.ne.s32.totalorder %s69, %s70
      %p79 = scmp.eq.s32.totalorder %s17, 0
      %p80 = por %p78, %p79
      %p81 = scmp.ne.s32.totalorder %s69, %s70
      %p82 = scmp.eq.s32.totalorder %s18, 1
      %p83 = por %p81, %p82
      %p85 = scmp.ne.s32.totalorder %s70, %s84
      %p86 = scmp.eq.s32.totalorder %s18, 0
      %p87 = por %p85, %p86
      %s88 = ssub.s32 %s12, %s19
      %p89 = scmp.eq.s32.totalorder %s88, 0
      %s91 = sadd.s32 %s90, 1
      %s92 = scalar_select %p89, %s90, %s91
      %p95 = pneg %p89
      %p96 = scmp.eq.s32.totalorder %s12, 1
      %p97 = por %p95, %p96
      %p98 = scmp.ne.s32.totalorder %s90, %s93
      %p99 = scmp.eq.s32.totalorder %s12, 0
      %p100 = por %p98, %p99
      %p101 = scmp.ne.s32.totalorder %s90, %s93
      %p102 = scmp.eq.s32.totalorder %s17, 1
      %p103 = por %p101, %p102
      %p104 = scmp.ne.s32.totalorder %s93, %s94
      %p105 = scmp.eq.s32.totalorder %s17, 0
      %p106 = por %p104, %p105
      %p107 = scmp.ne.s32.totalorder %s93, %s94
      %p108 = scmp.eq.s32.totalorder %s18, 1
      %p109 = por %p107, %p108
      %p111 = scmp.ne.s32.totalorder %s94, %s110
      %p112 = scmp.eq.s32.totalorder %s18, 0
      %p113 = por %p111, %p112
      %p114 = scmp.le.s32.totalorder 1, %s12
      %p115 = scmp.lt.s32.totalorder %s12, 3
      %p116 = pnand %p114, %p115
      %p117 = pneg %p116
      // Predicated region
      $region9: #{tpu_custom_call.1} parent=5 // pred_check
        _
      $region10: #{tpu_custom_call.1} parent=5 // pred_check_branch
        %119 = sbr.rel (%p116) target = $region12
      $region11: #{tpu_custom_call.1} parent=5 // pred_region
        %s120 = ssub.s32 %s12, 1
        // Predicated region
        $region13: #{tpu_custom_call.1} parent=11 // pred_check
          %p121 = pneg %p59
        $region14: #{tpu_custom_call.1} parent=11 // pred_check_branch
          %123 = sbr.rel (%p121) target = $region16
        $region15: #{tpu_custom_call.1} parent=11 // pred_region
          _
        $region16: #{tpu_custom_call.1} parent=11 // pred_fallthru
          _
        // Predicated region
        $region17: #{tpu_custom_call.1} parent=11 // pred_check
          %p124 = pneg %p80
        $region18: #{tpu_custom_call.1} parent=11 // pred_check_branch
          %126 = sbr.rel (%p124) target = $region20
        $region19: #{tpu_custom_call.1} parent=11 // pred_region
          _
        $region20: #{tpu_custom_call.1} parent=11 // pred_fallthru
          _
      $region12: #{tpu_custom_call.1} parent=5 // pred_fallthru
        _
      %p127 = scmp.lt.s32.totalorder %s12, 2
      // Predicated region
      $region21: #{tpu_custom_call.1} parent=5 // pred_check
        %p128 = pneg %p127
      $region22: #{tpu_custom_call.1} parent=5 // pred_check_branch
        %130 = sbr.rel (%p128) target = $region24
      $region23: #{tpu_custom_call.1} parent=5 // pred_region
        // Predicated region
        $region25: #{tpu_custom_call.1} parent=23 // pred_check
          %p131 = pneg %p32
        $region26: #{tpu_custom_call.1} parent=23 // pred_check_branch
          %133 = sbr.rel (%p131) target = $region28
        $region27: #{tpu_custom_call.1} parent=23 // pred_region
          %p134 = scmp.lt.s32.totalorder %s12, 1
          %s135 = scalar_select %p134, %s12, 1
          %s136 = smul.addr %s135, 8
          %s137 = scalar_lea.vmem %s0, %s136
        $region28: #{tpu_custom_call.1} parent=23 // pred_fallthru
          _
      $region24: #{tpu_custom_call.1} parent=5 // pred_fallthru
        _
      %p138 = scmp.le.s32.totalorder 1, %s12
      %p139 = scmp.lt.s32.totalorder %s12, 3
      %p140 = pnand %p138, %p139
      %p141 = pneg %p140
      // Predicated region
      $region29: #{tpu_custom_call.1} parent=5 // pred_check
        _
      $region30: #{tpu_custom_call.1} parent=5 // pred_check_branch
        %143 = sbr.rel (%p140) target = $region32
      $region31: #{tpu_custom_call.1} parent=5 // pred_region
        %s144 = ssub.s32 %s12, 1
        %p145 = scmp.lt.s32.totalorder %s17, 1
        %s146 = scalar_select %p145, %s17, 1
        %s147 = smul.addr %s146, 8
        %s148 = scalar_lea.vmem %s0, %s147
        %p149 = pneg %p38
        %p150 = pneg %p35
        %p151 = pneg %p59
        %p152 = pneg %p56
        %p153 = pneg %p80
        %p154 = pneg %p77
        %p155 = pneg %p106
        %p156 = pneg %p103
        %s157 = sand.u32 %s93, 1
        %s158 = scalar_lea.sflag [#allocation3], %s157
        %s159 = sand.u32 %s93, 1
        %s160 = smul.addr %s159, 8
        %s161 = scalar_lea.vmem [#allocation2], %s160
        %p162 = scmp.lt.s32.totalorder %s17, 1
        %s163 = scalar_select %p162, %s17, 1
        %s164 = smul.addr %s163, 8
        %s165 = scalar_lea.vmem %s0, %s164
        %v166 = vld [vmem:[%s165] sm:$0xff]
        %v167 = vld [vmem:[%s1] sm:$0xff]
        %v168 = vld [vmem:[%s1 + $0x8] sm:$0xff]
        %v169 = vld [vmem:[%s1 + $0x10] sm:$0xff]
        %v170 = vld [vmem:[%s1 + $0x18] sm:$0xff]
        %v171 = vld [vmem:[%s1 + $0x20] sm:$0xff]
        %v172 = vld [vmem:[%s1 + $0x28] sm:$0xff]
        %v173 = vld [vmem:[%s1 + $0x30] sm:$0xff]
        %v174 = vld [vmem:[%s1 + $0x38] sm:$0xff]
        %v175 = vld [vmem:[%s1 + $0x40] sm:$0xff]
        %v176 = vld [vmem:[%s1 + $0x48] sm:$0xff]
        %v177 = vld [vmem:[%s1 + $0x50] sm:$0xff]
        %v178 = vld [vmem:[%s1 + $0x58] sm:$0xff]
        %v179 = vld [vmem:[%s1 + $0x60] sm:$0xff]
        %v180 = vld [vmem:[%s1 + $0x68] sm:$0xff]
        %v181 = vld [vmem:[%s1 + $0x70] sm:$0xff]
        %v182 = vld [vmem:[%s1 + $0x78] sm:$0xff]
        %183 = vmatpush.msra.mxu0 %v182
        %184 = vmatpush.msra.mxu0 %v181
        %185 = vmatpush.msra.mxu0 %v180
        %186 = vmatpush.msra.mxu0 %v179
        %187 = vmatpush.msra.mxu0 %v178
        %188 = vmatpush.msra.mxu0 %v177
        %189 = vmatpush.msra.mxu0 %v176
        %190 = vmatpush.msra.mxu0 %v175
        %191 = vmatpush.msra.mxu0 %v174
        %192 = vmatpush.msra.mxu0 %v173
        %193 = vmatpush.msra.mxu0 %v172
        %194 = vmatpush.msra.mxu0 %v171
        %195 = vmatpush.msra.mxu0 %v170
        %196 = vmatpush.msra.mxu0 %v169
        %197 = vmatpush.msra.mxu0 %v168
        %198 = vmatpush.msra.mxu0 %v167
        %199 = vmatmul.f32.gmra.mxu0 %v166
        %v200 = vpop.f32.mrf.mxu0
        %v201 = vadd.f32 0.0, %v200
        %202 = vdwg.mxu0
        %v203 = vmax.f32 %v201, 0.0
        %v204 = vld [vmem:[%s2] sm:$0xff]
        %v205 = vld [vmem:[%s2 + $0x8] sm:$0xff]
        %vm206 = vcmask 130048
        %v208 = vsel %vm206, %v203, 0
        %210 = vmatpush.msra.mxu0 0.0
        %211 = vmatpush.msra.mxu0 0.0
        %212 = vmatpush.msra.mxu0 0.0
        %213 = vmatpush.msra.mxu0 0.0
        %214 = vmatpush.msra.mxu0 0.0
        %215 = vmatpush.msra.mxu0 0.0
        %216 = vmatpush.msra.mxu0 0.0
        %217 = vmatpush.msra.mxu0 0.0
        %218 = vmatpush.msra.mxu0 0.0
        %219 = vmatpush.msra.mxu0 0.0
        %220 = vmatpush.msra.mxu0 0.0
        %221 = vmatpush.msra.mxu0 0.0
        %222 = vmatpush.msra.mxu0 0.0
        %223 = vmatpush.msra.mxu0 0.0
        %224 = vmatpush.msra.mxu0 %v205
        %225 = vmatpush.msra.mxu0 %v204
        %226 = vmatmul.f32.gmra.mxu0 %v208
        %v227 = vpop.f32.mrf.mxu0
        %v228 = vadd.f32 0.0, %v227
        %229 = vdwg.mxu0
        %v230 = vxor.u32 %v228, 2147483648
        %v231 = vmul.f32 %v230, 1.442695
        %v232 = vpow.pop %v231
        %v233 = vadd.f32 %v232, 1.0
        %v234 = vrcp.pop %v233
        %v235 = vmul.f32 %v233, %v234
        %v236 = vsub.f32 1.0, %v235
        %v237 = vmul.f32 %v234, %v236
        %v238 = vadd.f32 %v234, %v237
        %vm239 = vweird.f32 %v233
        %vm240 = vweird.f32 %v234
        %vm241 = vmor %vm239, %vm240
        %v242 = vsel %vm241, %v234, %v238
        %v243 = vand.u32 2147483647, %v233
        %vm244 = vcmp.eq.f32.partialorder %v243, 8.507059e+37
        %v245 = vand.u32 %v233, 2147483648
        %v246 = vor.u32 1.1754944e-38, %v245
        %v247 = vsel %vm244, %v246, %v242
        %v248 = vmul.f32 1.0, %v247
        %v249 = vmul.f32 %v166, %v248
        %250 = vst [vmem:[%s161] sm:$0xff] %v249
        %s251 = sand.u32 %s93, 1
        %s252 = scalar_lea.sflag [#allocation3], %s251
        %s253 = sand.u32 %s93, 1
        %s254 = smul.addr %s253, 8
        %s255 = scalar_lea.vmem [#allocation2], %s254
        // Predicated region
        $region33: #{tpu_custom_call.1} parent=31 // pred_check
          %p256 = pneg %p103
        $region34: #{tpu_custom_call.1} parent=31 // pred_check_branch
          %258 = sbr.rel (%p256) target = $region36
        $region35: #{tpu_custom_call.1} parent=31 // pred_region
          %260 = vsyncadd %s252, 0
          %s261 = smul.addr %s17, 8
          %s262 = scalar_lea.hbm %s3, %s261
          %s264 = sshll.u32 %s255, 4
          %s265 = int_to_ptr.vmem [resolvable:$true] %s264
          %s266 = sshll.u32 %s262, 4
          %s267 = int_to_ptr.hbm [resolvable:$true] %s266
          %269 = dma.vmem_to_hbm [thread:$0]  %s265, 128, %s267, %s252
        $region36: #{tpu_custom_call.1} parent=31 // pred_fallthru
          _
      $region32: #{tpu_custom_call.1} parent=5 // pred_fallthru
        _
      %p270 = scmp.le.s32.totalorder 2, %s12
      // Predicated region
      $region37: #{tpu_custom_call.1} parent=5 // pred_check
        %p271 = pneg %p270
      $region38: #{tpu_custom_call.1} parent=5 // pred_check_branch
        %273 = sbr.rel (%p271) target = $region40
      $region39: #{tpu_custom_call.1} parent=5 // pred_region
        %s274 = ssub.s32 %s12, 2
        // Predicated region
        $region41: #{tpu_custom_call.1} parent=39 // pred_check
          %p275 = pneg %p109
        $region42: #{tpu_custom_call.1} parent=39 // pred_check_branch
          %277 = sbr.rel (%p275) target = $region44
        $region43: #{tpu_custom_call.1} parent=39 // pred_region
          %s278 = sand.u32 %s94, 1
          %s279 = scalar_lea.sflag [#allocation3], %s278
          %s280 = sand.u32 %s94, 1
          %s281 = smul.addr %s280, 8
          %s282 = scalar_lea.vmem [#allocation2], %s281
          %284 = dma.done %s279, 128
        $region44: #{tpu_custom_call.1} parent=39 // pred_fallthru
          _
      $region40: #{tpu_custom_call.1} parent=5 // pred_fallthru
        _
    $region6: #{tpu_custom_call.1} parent=1 // loop_footer
      %s16 = sadd.s32 1, %s12
    $region7: #{tpu_custom_call.1} parent=1 // loop_footer_branch
      %11 = sbr.rel target = $region3
    $region8: #{tpu_custom_call.1} parent=1 // loop_exit
      _
    %285 = vsyncpa [#allocation3], 1
    %s286 = scalar_lea.sflag [#allocation3], 1
    %287 = vsyncpa %s286, 1

</llo_original>
